<compile_context>
chip_gen: v7x
topology: tpu7x:2x2x1
jax: 0.10.0
libtpu: 0.0.40
codegen_flags: <defaults>
</compile_context>

<pallas_src>
import math

import jax
import jax.numpy as jnp
from jax.experimental import pallas as pl
from jax.experimental.pallas import tpu as pltpu


# --------------------------------------------------------------------------
# host-side planning helpers
# --------------------------------------------------------------------------
_SUBLANE = {4: 8, 2: 16, 1: 32}     # min sublane tile per dtype itemsize


def _cdiv(a, b):
    return -(-a // b)


def _round_up(a, b):
    return _cdiv(a, b) * b


def _vmem_capacity_bytes():
    try:
        return int(pltpu.get_tpu_info().vmem_capacity_bytes)
    except Exception:
        return 64 << 20             # conservative (v7x per-core VMEM)


def _num_tensorcores():
    """Best-effort TensorCore count (sizes the leading 'parallel' split)."""
    try:
        info = pltpu.get_tpu_info()
        for attr in ("num_cores", "tensor_cores_per_chip", "cores_per_chip",
                     "num_tensor_cores", "core_count"):
            v = getattr(info, attr, None)
            if v is not None and not callable(v):
                try:
                    v = int(v)
                except Exception:
                    continue
                if 0 < v <= 8:
                    return v
    except Exception:
        pass
    try:
        v = getattr(jax.devices()[0], "num_cores", None)
        if isinstance(v, int) and 0 < v <= 8:
            return v
    except Exception:
        pass
    # Unknown -> assume megacore.  With the ragged-tail scheme an unused second
    # partial costs at most one tiny idempotent tail block on 1-TC chips.
    return 2


def _fold_factor(C, M):
    """Lane-fold factor f: view (M, C) as (M//f, C*f).

    Picks the smallest f with C*f a multiple of 128 (lane-dense stores), then
    shrinks it to a divisor of M so the fold is a *free* reshape (no pad copy).
    """
    f = 128 // math.gcd(C, 128)
    return max(1, math.gcd(f, M))


def _plan_tiles(M_fold, C_fold, in_dtype, out_dtype, tile_rows=None,
                parallel_split=None):
    """Choose (tm, P, nb_inner, nb_valid, S, vmem_limit)."""
    in_b = jnp.dtype(in_dtype).itemsize
    out_b = jnp.dtype(out_dtype).itemsize
    sub = max(_SUBLANE.get(in_b, 8), _SUBLANE.get(out_b, 8))

    cap = _vmem_capacity_bytes()
    # Per-row VMEM: double-buffered x + y tiles plus ~4 f32 tile-sized body
    # temporaries (f32 upcast / squares / masked squares) as safety margin.
    row_bytes = 2 * C_fold * (in_b + out_b) + 4 * C_fold * 4
    budget = int(cap * 0.7)

    if tile_rows is None:
        tm = (budget // max(row_bytes, 1)) // sub * sub
        tm = max(sub, min(tm, 32768))
    else:
        tm = max(sub, _round_up(int(tile_rows), sub))
    if tm >= M_fold:
        tm = M_fold                 # single full-extent block (no ragged tail)
    nb_valid = _cdiv(M_fold, tm)

    if parallel_split is None:
        P = min(_num_tensorcores(), 2, nb_valid)
    else:
        P = min(int(parallel_split), nb_valid)
    P = max(P, 1)
    nb_inner = _cdiv(nb_valid, P)

    S = 8 if tm % 8 == 0 else 1     # sublane rows kept per ssq partial

    usage = (row_bytes * tm + 4 * C_fold * (in_b + out_b)
             + 4 * S * C_fold * 4 + (2 << 20))
    vmem_limit = min(int(cap * 0.95), max(usage + (8 << 20), 32 << 20))
    return tm, P, nb_inner, nb_valid, S, vmem_limit


def _row_map(nb_inner, nb_valid, clamp):
    last = nb_valid - 1
    if clamp:
        # Intended blocks past the end are redirected to the last valid block
        # (ssq contributions are masked out; y rewrite is idempotent).
        def idx(p, i):
            return (jnp.minimum(p * nb_inner + i, last), 0)
    else:
        def idx(p, i):
            return (p * nb_inner + i, 0)
    return idx


# --------------------------------------------------------------------------
# kernel bodies
# --------------------------------------------------------------------------
def _make_ssq_kernels(tm, Cf, S, nb_inner, M_fold, needs_mask):
    """Build (ssq_only_kernel, fused_norm_ssq_kernel) specialized to the plan."""
    G = tm // S

    def partial_ssq(x_val):
        # (tm, Cf) -> (G, S, Cf): layout-preserving sublane grouping, so the
        # axis-0 reduction is pure VALU vreg adds (no XLU cross-sublane reduce).
        x32 = x_val.astype(jnp.float32).reshape(G, S, Cf)
        sq = x32 * x32
        if needs_mask:
            start = (pl.program_id(0) * nb_inner + pl.program_id(1)) * tm
            row = (jax.lax.broadcasted_iota(jnp.int32, (G, S, 1), 0) * S
                   + jax.lax.broadcasted_iota(jnp.int32, (G, S, 1), 1))
            sq = jnp.where(row < (M_fold - start), sq, 0.0)
        return jnp.sum(sq, axis=0)          # (S, Cf)

    def ssq_kernel(x_ref, ssq_ref):
        @pl.when(pl.program_id(1) == 0)
        def _():
            ssq_ref[...] = jnp.zeros_like(ssq_ref)
        ssq_ref[...] += partial_ssq(x_ref[...])[None]

    def fused_kernel(x_ref, scale_ref, bias_ref, y_ref, ssq_ref):
        @pl.when(pl.program_id(1) == 0)
        def _():
            ssq_ref[...] = jnp.zeros_like(ssq_ref)
        x = x_ref[...]
        ssq_ref[...] += partial_ssq(x)[None]
        y_ref[...] = (x * scale_ref[...] + bias_ref[...]).astype(y_ref.dtype)

    return ssq_kernel, fused_kernel


def _norm_kernel(x_ref, scale_ref, bias_ref, y_ref):
    y_ref[...] = (x_ref[...] * scale_ref[...] + bias_ref[...]).astype(y_ref.dtype)


# --------------------------------------------------------------------------
# pallas_call wrappers
# --------------------------------------------------------------------------
def _ssq_partials(xf, *, tm, P, nb_inner, nb_valid, S, vmem_limit):
    M_fold, Cf = xf.shape
    needs_mask = (P * nb_inner * tm) != M_fold
    clamp = (P * nb_inner) > nb_valid
    ssq_kernel, _ = _make_ssq_kernels(tm, Cf, S, nb_inner, M_fold, needs_mask)
    return pl.pallas_call(
        ssq_kernel,
        out_shape=jax.ShapeDtypeStruct((P, S, Cf), jnp.float32),
        grid=(P, nb_inner),
        in_specs=[pl.BlockSpec((tm, Cf), _row_map(nb_inner, nb_valid, clamp))],
        out_specs=pl.BlockSpec((1, S, Cf), lambda p, i: (p, 0, 0)),
        compiler_params=pltpu.CompilerParams(
            dimension_semantics=("parallel", "arbitrary"),
            vmem_limit_bytes=vmem_limit),
    )(xf)


def _fused_norm_ssq(xf, scale_f, bias_f, *, tm, P, nb_inner, nb_valid, S,
                    out_dtype, vmem_limit):
    M_fold, Cf = xf.shape
    needs_mask = (P * nb_inner * tm) != M_fold
    clamp = (P * nb_inner) > nb_valid
    _, fused_kernel = _make_ssq_kernels(tm, Cf, S, nb_inner, M_fold, needs_mask)
    row_map = _row_map(nb_inner, nb_valid, clamp)
    y, parts = pl.pallas_call(
        fused_kernel,
        out_shape=(jax.ShapeDtypeStruct((M_fold, Cf), out_dtype),
                   jax.ShapeDtypeStruct((P, S, Cf), jnp.float32)),
        grid=(P, nb_inner),
        in_specs=[
            pl.BlockSpec((tm, Cf), row_map),
            pl.BlockSpec((1, Cf), lambda p, i: (0, 0)),
            pl.BlockSpec((1, Cf), lambda p, i: (0, 0)),
        ],
        out_specs=(
            pl.BlockSpec((tm, Cf), row_map),
            pl.BlockSpec((1, S, Cf), lambda p, i: (p, 0, 0)),
        ),
        compiler_params=pltpu.CompilerParams(
            dimension_semantics=("parallel", "arbitrary"),
            vmem_limit_bytes=vmem_limit),
    )(xf, scale_f, bias_f)
    return y, parts


def _normalize(xf, scale_f, bias_f, *, tm, nb_valid, out_dtype, vmem_limit):
    M_fold, Cf = xf.shape
    return pl.pallas_call(
        _norm_kernel,
        out_shape=jax.ShapeDtypeStruct((M_fold, Cf), out_dtype),
        grid=(nb_valid,),
        in_specs=[
            pl.BlockSpec((tm, Cf), lambda i: (i, 0)),
            pl.BlockSpec((1, Cf), lambda i: (0, 0)),
            pl.BlockSpec((1, Cf), lambda i: (0, 0)),
        ],
        out_specs=pl.BlockSpec((tm, Cf), lambda i: (i, 0)),
        compiler_params=pltpu.CompilerParams(
            dimension_semantics=("parallel",),
            vmem_limit_bytes=vmem_limit),
    )(xf, scale_f, bias_f)


# --------------------------------------------------------------------------
# Functional MaskPowerNorm.  Buffers (running_phi, ema_gz, iters,
# accumulated_var) are carried as an explicit state dict instead of in-place
# .copy_() mutation; the forward returns (output, new_state).
# --------------------------------------------------------------------------
def init_mask_power_norm(num_features, key=None):
    if key is None:
        key = jax.random.PRNGKey(0)
    kw, kb = jax.random.split(key)
    params = {
        "weight": jnp.ones((num_features,), jnp.float32)
                  + 0.1 * jax.random.normal(kw, (num_features,), jnp.float32),
        "bias": 0.01 * jax.random.normal(kb, (num_features,), jnp.float32),
    }
    state = {
        "running_phi": jnp.ones((1, num_features, 1, 1), jnp.float32),
        "ema_gz": jnp.zeros((1, num_features, 1, 1), jnp.float32),
        "iters": 0,                 # host int (PyTorch does current_iter.item())
        "accumulated_var": jnp.zeros((1, num_features, 1, 1), jnp.float32),
    }
    return params, state


def mask_power_norm_forward(x, params, state, *, eps=1e-5, afwd=0.9, abkw=0.9,
                            warmup_iters=10000, accumulation_step=8,
                            training=True, tile_rows=None, parallel_split=None,
                            bf16_affine=True):
    # TODO(synk): only the input_mask=None path is implemented (the module's
    # masked path relies on a shape-dependent .squeeze(0) that only makes sense
    # for a leading singleton dim).  `abkw` / ema_gz only affect the backward.
    shaped_input = (x.ndim == 2)
    if shaped_input:
        x = x[None, ...]                                  # (1, B, C)
    T, B, C = x.shape
    M = T * B
    out_dtype = x.dtype

    weight = params["weight"].astype(jnp.float32).reshape(C)
    bias = params["bias"].astype(jnp.float32).reshape(C)

    # y = x*scale + bias math dtype: bf16 when the stream is bf16 (bf16 VALU on
    # v6e/v7x; on v5e the compiler widens, still correct).  ssq is always f32.
    affine_dtype = (jnp.bfloat16
                    if (bf16_affine and x.dtype == jnp.bfloat16)
                    else jnp.float32)

    # ---- free lane folding + tiling plan (no padding, no extra copies) ----
    f = _fold_factor(C, M)
    Cf = C * f
    M_fold = M // f
    xf = x.reshape(M_fold, Cf)            # contiguous reshape: no data movement

    tm, P, nb_inner, nb_valid, S, vmem_limit = _plan_tiles(
        M_fold, Cf, x.dtype, out_dtype,
        tile_rows=tile_rows, parallel_split=parallel_split)

    def tile_c(v, dtype):                 # per-channel (C,) -> folded (1, Cf)
        return jnp.tile(v, f).reshape(1, Cf).astype(dtype)

    def unfold(parts):                    # (P, S, Cf) partials -> (C,)
        return jnp.sum(parts, axis=(0, 1)).reshape(f, C).sum(axis=0)

    bias_f = tile_c(bias, affine_dtype)
    new_state = dict(state)

    if training:
        current_iter = int(state["iters"]) + 1            # PyTorch .item()
        new_state["iters"] = current_iter
        inv_n = 1.0 / float(M)                            # mask=None -> T*B rows

        if current_iter <= warmup_iters:
            # Warmup: denom is the fresh batch statistic -> reduce, then normalize.
            # TODO(synk): merge into one 2-phase pallas_call / keep x VMEM-resident.
            parts = _ssq_partials(xf, tm=tm, P=P, nb_inner=nb_inner,
                                  nb_valid=nb_valid, S=S, vmem_limit=vmem_limit)
            var_c = unfold(parts) * inv_n                 # (C,)
            scale_f = tile_c(weight / jnp.sqrt(var_c + eps), affine_dtype)
            yf = _normalize(xf, scale_f, bias_f, tm=tm, nb_valid=nb_valid,
                            out_dtype=out_dtype, vmem_limit=vmem_limit)
        else:
            # Steady state: denom = running_phi is batch-independent, so fuse
            # the ssq reduction into the normalize pass (read x from HBM once).
            phi_c = state["running_phi"].astype(jnp.float32).reshape(C)
            scale_f = tile_c(weight / jnp.sqrt(phi_c + eps), affine_dtype)
            yf, parts = _fused_norm_ssq(xf, scale_f, bias_f, tm=tm, P=P,
                                        nb_inner=nb_inner, nb_valid=nb_valid,
                                        S=S, out_dtype=out_dtype,
                                        vmem_limit=vmem_limit)
            var_c = unfold(parts) * inv_n

        # ---- buffer side effects (tiny (1,C,1,1) ops, plain JAX) ----
        # Matches PowerFunction: during warmup BOTH the running-average and the
        # EMA update are applied in the same accumulation step.
        var4 = var_c.reshape(1, C, 1, 1)
        acc = state["accumulated_var"].astype(jnp.float32) + var4 / accumulation_step
        running_phi = state["running_phi"].astype(jnp.float32)
        if current_iter % accumulation_step == 0:
            if current_iter < warmup_iters:
                running_phi = (running_phi * (current_iter - 1) / current_iter
                               + acc.mean(axis=0, keepdims=True) / current_iter)
            running_phi = (afwd * running_phi
                           + (1.0 - afwd) * acc.mean(axis=0, keepdims=True))
            acc = jnp.zeros_like(acc)
        new_state["accumulated_var"] = acc
        new_state["running_phi"] = running_phi
    else:
        phi_c = state["running_phi"].astype(jnp.float32).reshape(C)
        scale_f = tile_c(weight / jnp.sqrt(phi_c + eps), affine_dtype)
        yf = _normalize(xf, scale_f, bias_f, tm=tm, nb_valid=nb_valid,
                        out_dtype=out_dtype, vmem_limit=vmem_limit)

    out = yf.reshape(T, B, C)             # free reshape: no slicing needed
    if shaped_input:
        out = out[0]
    return out, new_state


# --------------------------------------------------------------------------
if __name__ == "__main__":
    key = jax.random.PRNGKey(0)
    k_x, k_p = jax.random.split(key)

    # --- 1) small module-like shape: seq=8, batch=2, hidden=32 (lane-folded) ---
    T, B, C = 8, 2, 32
    x = jax.random.normal(k_x, (T, B, C), jnp.float32)
    params, state = init_mask_power_norm(C, key=k_p)

    # Training, warmup branch (iter=1): denom = fresh batch variance.
    out, st1 = mask_power_norm_forward(x, params, state, training=True)
    out = jax.block_until_ready(out)

    var_ref = jnp.mean(x.reshape(-1, C) ** 2, axis=0)
    y_ref = params["weight"] * (x / jnp.sqrt(var_ref + 1e-5)) + params["bias"]
    assert out.shape == (T, B, C)
    assert jnp.allclose(out, y_ref, atol=1e-5, rtol=1e-5)
    assert st1["iters"] == 1
    assert jnp.allclose(st1["accumulated_var"].reshape(C), var_ref / 8,
                        atol=1e-5, rtol=1e-5)

    # Training, steady-state branch (past warmup): fused normalize+ssq kernel.
    st_post = dict(st1)
    st_post["iters"] = 10000                     # next iter = 10001 > warmup
    out2, st2 = mask_power_norm_forward(x, params, st_post, training=True)
    out2 = jax.block_until_ready(out2)
    phi = st_post["running_phi"].reshape(C)
    y2_ref = params["weight"] * (x / jnp.sqrt(phi + 1e-5)) + params["bias"]
    assert jnp.allclose(out2, y2_ref, atol=1e-5, rtol=1e-5)
    assert jnp.allclose(
        (st2["accumulated_var"] - st1["accumulated_var"]).reshape(C),
        var_ref / 8, atol=1e-5, rtol=1e-5)

    # Eval mode.
    out_eval, _ = mask_power_norm_forward(x, params, st2, training=False)
    out_eval = jax.block_until_ready(out_eval)
    assert jnp.allclose(out_eval, y2_ref, atol=1e-5, rtol=1e-5)

    # --- 2) multi-block / per-core-partial path: C=128, M=256, forced split ---
    T2, B2, C2 = 64, 4, 128
    x2 = jax.random.normal(jax.random.PRNGKey(1), (T2, B2, C2), jnp.float32)
    p2, s2 = init_mask_power_norm(C2, key=jax.random.PRNGKey(2))

    out_w, s2a = mask_power_norm_forward(x2, p2, s2, training=True,
                                         tile_rows=64, parallel_split=2)
    out_w = jax.block_until_ready(out_w)
    var2_ref = jnp.mean(x2.reshape(-1, C2) ** 2, axis=0)
    yw_ref = p2["weight"] * (x2 / jnp.sqrt(var2_ref + 1e-5)) + p2["bias"]
    assert jnp.allclose(out_w, yw_ref, atol=1e-5, rtol=1e-5)

    s2b = dict(s2a)
    s2b["iters"] = 20000
    out_s, s2c = mask_power_norm_forward(x2, p2, s2b, training=True,
                                         tile_rows=64, parallel_split=2)
    out_s = jax.block_until_ready(out_s)
    phi2 = s2b["running_phi"].reshape(C2)
    ys_ref = p2["weight"] * (x2 / jnp.sqrt(phi2 + 1e-5)) + p2["bias"]
    assert jnp.allclose(out_s, ys_ref, atol=1e-5, rtol=1e-5)
    assert jnp.allclose(
        (s2c["accumulated_var"] - s2a["accumulated_var"]).reshape(C2),
        var2_ref / 8, atol=1e-5, rtol=1e-5)

    # --- 3) ragged path: M=21 rows, C=96, forced tiny tiles + split (mask/clamp) ---
    T3, B3, C3 = 7, 3, 96
    x3 = jax.random.normal(jax.random.PRNGKey(3), (T3, B3, C3), jnp.float32)
    p3, s3 = init_mask_power_norm(C3, key=jax.random.PRNGKey(4))

    out3, s3a = mask_power_norm_forward(x3, p3, s3, training=True,
                                        tile_rows=8, parallel_split=2)
    out3 = jax.block_until_ready(out3)
    var3_ref = jnp.mean(x3.reshape(-1, C3) ** 2, axis=0)
    y3_ref = p3["weight"] * (x3 / jnp.sqrt(var3_ref + 1e-5)) + p3["bias"]
    assert jnp.allclose(out3, y3_ref, atol=1e-5, rtol=1e-5)
    assert jnp.allclose(s3a["accumulated_var"].reshape(C3), var3_ref / 8,
                        atol=1e-5, rtol=1e-5)

    s3b = dict(s3a)
    s3b["iters"] = 20000
    out3s, s3c = mask_power_norm_forward(x3, p3, s3b, training=True,
                                         tile_rows=8, parallel_split=2)
    out3s = jax.block_until_ready(out3s)
    phi3 = s3b["running_phi"].reshape(C3)
    y3s_ref = p3["weight"] * (x3 / jnp.sqrt(phi3 + 1e-5)) + p3["bias"]
    assert jnp.allclose(out3s, y3s_ref, atol=1e-5, rtol=1e-5)
    assert jnp.allclose(
        (s3c["accumulated_var"] - s3a["accumulated_var"]).reshape(C3),
        var3_ref / 8, atol=1e-5, rtol=1e-5)

    # --- 4) bf16 stream (exercises the bf16 affine path in the fused kernel) ---
    T4, B4, C4 = 32, 4, 128
    x4 = jax.random.normal(jax.random.PRNGKey(5), (T4, B4, C4),
                           jnp.float32).astype(jnp.bfloat16)
    p4, s4 = init_mask_power_norm(C4, key=jax.random.PRNGKey(6))
    s4b = dict(s4)
    s4b["iters"] = 20000
    out4, s4c = mask_power_norm_forward(x4, p4, s4b, training=True)
    out4 = jax.block_until_ready(out4)
    x4f = x4.astype(jnp.float32)
    phi4 = s4b["running_phi"].reshape(C4)
    y4_ref = p4["weight"] * (x4f / jnp.sqrt(phi4 + 1e-5)) + p4["bias"]
    assert out4.dtype == jnp.bfloat16
    assert jnp.allclose(out4.astype(jnp.float32), y4_ref, atol=1e-1)
    var4_ref = jnp.mean(x4f.reshape(-1, C4) ** 2, axis=0)
    assert jnp.allclose(s4c["accumulated_var"].reshape(C4), var4_ref / 8,
                        atol=1e-4, rtol=1e-4)

    print("KERNEL_OK")
</pallas_src>

<mosaic_0001>
module attributes {stable_mosaic.version = 11 : i64} {
  func.func @ssq_kernel(%arg0: i32, %arg1: i32, %arg2: memref<4x128xf32, #tpu.memory_space<vmem>>, %arg3: memref<1x1x128xf32, #tpu.memory_space<vmem>>) attributes {dimension_semantics = [#tpu.dimension_semantics<parallel>, #tpu.dimension_semantics<arbitrary>], iteration_bounds = array<i64: 1, 1>, scalar_prefetch = 0 : i64, scratch_operands = 0 : i64, tpu.core_type = #tpu.core_type<tc>, window_params = [{transform_indices = @transform_0, window_bounds = array<i64: 4, 128>}, {transform_indices = @transform_1, window_bounds = array<i64: 1, 1, 128>}]} {
    %c0_i32 = arith.constant 0 : i32
    %0 = arith.cmpi eq, %arg1, %c0_i32 : i32
    %1 = arith.extui %0 : i1 to i32
    %c0_i32_0 = arith.constant 0 : i32
    %2 = arith.cmpi ne, %1, %c0_i32_0 : i32
    scf.if %2 {
      %cst_8 = arith.constant 0.000000e+00 : f32
      %11 = vector.broadcast %cst_8 : f32 to vector<1x1x128xf32>
      %c0_9 = arith.constant 0 : index
      %c0_10 = arith.constant 0 : index
      %c0_11 = arith.constant 0 : index
      %12 = vector.load %arg3[%c0_9, %c0_10, %c0_11] : memref<1x1x128xf32, #tpu.memory_space<vmem>>, vector<1x1x128xf32>
      tpu.vector_store %arg3[%c0_9, %c0_10, %c0_11], %11 {strides = array<i32>} : memref<1x1x128xf32, #tpu.memory_space<vmem>>, vector<1x1x128xf32>,
    } else {
    }
    %c0 = arith.constant 0 : index
    %c0_1 = arith.constant 0 : index
    %c0_2 = arith.constant 0 : index
    %3 = vector.load %arg3[%c0, %c0_1, %c0_2] : memref<1x1x128xf32, #tpu.memory_space<vmem>>, vector<1x1x128xf32>
    %c0_3 = arith.constant 0 : index
    %c0_4 = arith.constant 0 : index
    %4 = vector.load %arg2[%c0_3, %c0_4] : memref<4x128xf32, #tpu.memory_space<vmem>>, vector<4x128xf32>
    %5 = vector.shape_cast %4 : vector<4x128xf32> to vector<4x1x128xf32>
    %6 = arith.mulf %5, %5 : vector<4x1x128xf32>
    %cst = arith.constant dense<0.000000e+00> : vector<1x128xf32>
    %7 = vector.multi_reduction <add>, %6, %cst [0] : vector<4x1x128xf32> to vector<1x128xf32>
    %8 = vector.shape_cast %7 : vector<1x128xf32> to vector<1x1x128xf32>
    %9 = arith.addf %3, %8 : vector<1x1x128xf32>
    %c0_5 = arith.constant 0 : index
    %c0_6 = arith.constant 0 : index
    %c0_7 = arith.constant 0 : index
    %10 = vector.load %arg3[%c0_5, %c0_6, %c0_7] : memref<1x1x128xf32, #tpu.memory_space<vmem>>, vector<1x1x128xf32>
    tpu.vector_store %arg3[%c0_5, %c0_6, %c0_7], %9 {strides = array<i32>} : memref<1x1x128xf32, #tpu.memory_space<vmem>>, vector<1x1x128xf32>,
    return
  }
  func.func @transform_0(%arg0: i32, %arg1: i32) -> (i32, i32) {
    %c1_i32 = arith.constant 1 : i32
    %0 = arith.muli %arg0, %c1_i32 : i32
    %1 = arith.addi %0, %arg1 : i32
    %c0_i32 = arith.constant 0 : i32
    %c0_i32_0 = arith.constant 0 : i32
    return %1, %c0_i32 : i32, i32
  }
  func.func @transform_1(%arg0: i32, %arg1: i32) -> (i32, i32, i32) {
    %c0_i32 = arith.constant 0 : i32
    %c0_i32_0 = arith.constant 0 : i32
    %c0_i32_1 = arith.constant 0 : i32
    return %arg0, %c0_i32, %c0_i32_0 : i32, i32, i32
  }
}

</mosaic_0001>

<llo_original>
// kernel: tpu_custom_call.1
$region0: #{tpu_custom_call.1}
  #allocation0 [shape = 'u32[]', space=smem, size = 0x4, offset = 0x4, fixed_abs, tag = 'smem constant byte address 0x4 - core index']
  #allocation1 [shape = 'u32[144,128]{1,0:T(1,128)}', space=vmem, size = 0x12000, scoped, tag = 'internal scratch']
  %s0 = inlined_call_operand.hbm [shape: f32[4,128], index: 0, kind: input, shape index: {}]
  %s1 = inlined_call_operand.hbm [shape: f32[1,1,128], index: 1, kind: output, shape index: {}]
  %s2 = sld [smem:[#allocation0]]
  $region22: #{tpu_custom_call.1} parent=0
    _
  %s4 = ssub.s32 1, %s2
  %s5 = scalar_select 0, %s4, %s2
  $region1: #{tpu_custom_call.1} parent=0
    #allocation2 [shape = 'u8[2048]{0}', space=vmem, size = 0x800, scoped, tag = 'input window, operand 0, single buffered']
    #allocation3 [shape = 's32[1]{0}', space=sflag, size = 0x4, scoped, tag = 'scoped memory for tpu_custom_call.1']
    #allocation4 [shape = 's32[1]{0}', space=sflag, size = 0x4, scoped, tag = 'scoped memory for tpu_custom_call.1']
    #allocation5 [shape = 'u8[512]{0}', space=vmem, size = 0x400, scoped, tag = 'output window, operand 0, single buffered']
    %6 = vsyncpa [#allocation3], 0
    %7 = vsyncpa [#allocation4], 0
    // Predicated region
    $region2: #{tpu_custom_call.1} parent=1 // pred_check
      _
    $region3: #{tpu_custom_call.1} parent=1 // pred_check_branch
      %9 = sbr.rel (0) target = $region5
    $region4: #{tpu_custom_call.1} parent=1 // pred_region
      %s10 = sadd.s32 0, 0
      %s12 = ssub.s32 64, 64
      %13 = vsyncadd [#allocation3], %s12
      %s14 = smul.addr %s10, 64
      %s15 = scalar_lea.hbm %s0, %s14
      %s17 = sshll.u32 [#allocation2], 4
      %s18 = int_to_ptr.vmem [resolvable:$true] %s17
      %20 = dma.hbm_to_vmem [thread:$0]  %s15, 64, %s18, [#allocation3]
    $region5: #{tpu_custom_call.1} parent=1 // pred_fallthru
      _
    // Predicated region
    $region6: #{tpu_custom_call.1} parent=1 // pred_check
      _
    $region7: #{tpu_custom_call.1} parent=1 // pred_check_branch
      %22 = sbr.rel (0) target = $region9
    $region8: #{tpu_custom_call.1} parent=1 // pred_region
      %23 = dma.done [#allocation3], 64
    $region9: #{tpu_custom_call.1} parent=1 // pred_fallthru
      _
    %s24 = sadd.s32 0, 0
    %p25 = scmp.eq.s32.totalorder 0, 0
    // Predicated region
    $region10: #{tpu_custom_call.1} parent=1 // pred_check
      %p26 = pneg %p25
    $region11: #{tpu_custom_call.1} parent=1 // pred_check_branch
      %28 = sbr.rel (%p26) target = $region13
    $region12: #{tpu_custom_call.1} parent=1 // pred_region
      %29 = vst [vmem:[#allocation5] sm:$0x1] 0.0
    $region13: #{tpu_custom_call.1} parent=1 // pred_fallthru
      _
    %v30 = vld [vmem:[#allocation5] sm:$0x1]
    %v31 = vld [vmem:[#allocation2] sm:$0xf]
    %v34 = vunpack.c.l.s4 1966171168
    %v35 = vunpack.c.0.s8 %v34
    %v36 = vlaneseq
    %v37 = vshrl.u32 %v36, 7
    %v38 = vsub.s32 %v35, %v37
    %v39 = vrot.slane %v31, %v38
    %v40 = vcombine.high %v39, %v39
    %v42 = vunpack.c.l.s4 1966171168
    %v43 = vunpack.c.0.s8 %v42
    %v44 = vlaneseq
    %v45 = vshrl.u32 %v44, 7
    %v46 = vsub.s32 %v43, %v45
    %v47 = vrot.slane %v39, %v46
    %v49 = vunpack.c.l.s4 1966171168
    %v50 = vunpack.c.0.s8 %v49
    %v51 = vlaneseq
    %v52 = vshrl.u32 %v51, 7
    %v53 = vsub.s32 %v50, %v52
    %v54 = vrot.slane %v40, %v53
    %v55 = vcombine.high %v47, %v47
    %v56 = vcombine.high %v54, %v54
    %v61 = vmul.f32 %v47, %v47
    %v62 = vmul.f32 %v54, %v54
    %v63 = vmul.f32 %v55, %v55
    %v64 = vmul.f32 %v56, %v56
    %vm65 = vcmask 1040384
    %v66 = vsel %vm65, %v61, 0.0
    %v67 = vsel %vm65, %v62, 0.0
    %v68 = vadd.f32 %v66, %v67
    %v69 = vsel %vm65, %v63, 0.0
    %v70 = vadd.f32 %v68, %v69
    %v71 = vsel %vm65, %v64, 0.0
    %v72 = vadd.f32 %v70, %v71
    %v73 = vadd.f32 %v30, %v72
    %74 = vst [vmem:[#allocation5] sm:$0x1] %v73
    // Predicated region
    $region14: #{tpu_custom_call.1} parent=1 // pred_check
      _
    $region15: #{tpu_custom_call.1} parent=1 // pred_check_branch
      %76 = sbr.rel (0) target = $region17
    $region16: #{tpu_custom_call.1} parent=1 // pred_region
      %s78 = ssub.s32 16, 16
      %79 = vsyncadd [#allocation4], %s78
      %s81 = sshll.u32 [#allocation5], 4
      %s82 = int_to_ptr.vmem [resolvable:$true] %s81
      %84 = dma.vmem_to_hbm [thread:$0]  %s82, 16, %s1, [#allocation4]
    $region17: #{tpu_custom_call.1} parent=1 // pred_fallthru
      _
    // Predicated region
    $region18: #{tpu_custom_call.1} parent=1 // pred_check
      _
    $region19: #{tpu_custom_call.1} parent=1 // pred_check_branch
      %86 = sbr.rel (0) target = $region21
    $region20: #{tpu_custom_call.1} parent=1 // pred_region
      %87 = dma.done [#allocation4], 16
    $region21: #{tpu_custom_call.1} parent=1 // pred_fallthru
      _
    %88 = vsyncpa [#allocation3], 1
    %89 = vsyncpa [#allocation4], 1

</llo_original>
